<compile_context>
chip_gen: v6e
topology: v6e:2x2x1
jax: 0.10.0
libtpu: 0.0.40
codegen_flags: <defaults>
</compile_context>

<pallas_src>
import jax
import jax.numpy as jnp
from jax import lax
from jax.experimental import pallas as pl
from jax.experimental.pallas import tpu as pltpu

K = 5
PAD = 2
_VMEM_BUDGET = 24 * 1024 * 1024      # working-set target; safe on v5e/v6e/v7x


def _round_up(v, m):
    return -(-v // m) * m


def _pick_tile(L, tile_rows, Cin, Cout, xbytes, obytes):
    """Largest sequence tile (multiple of 8) whose working set fits the budget."""
    TL = max(8, min(_round_up(tile_rows, 8), _round_up(L, 8)))

    def est(tl):
        return (2 * (tl + 2 * PAD) * Cin * xbytes     # double-buffered halo'd input
                + 2 * tl * Cout * obytes              # double-buffered output blocks
                + 2 * K * Cin * Cout * 2              # bf16 weights (x2 buffering)
                + 2 * 128 * Cout * 4)                 # bias + slack

    while TL > 128 and est(TL) > _VMEM_BUDGET:
        TL = max(128, TL - 128)
    return TL


def sliceconv(x, weight, bias, *, tile_rows=2048, sub_rows=128, cout_chunk=256,
              out_dtype=None):
    """x: (L, Cin). weight: (Cout, Cin, K) [PyTorch Conv1d layout]. bias: (Cout,).

    sub_rows: rows per accumulator sub-chunk (128 is safe everywhere; 256 is a
              reasonable choice on v6e/v7x).
    out_dtype: defaults to x.dtype; pass jnp.bfloat16 to halve output HBM traffic
               if downstream tolerates it.
    """
    L, Cin = x.shape
    Cout, Cin_w, Kw = weight.shape
    assert Cin_w == Cin and Kw == K
    out_dtype = x.dtype if out_dtype is None else out_dtype
    xdt = x.dtype

    xbytes = jnp.dtype(x.dtype).itemsize
    obytes = jnp.dtype(out_dtype).itemsize
    TL = _pick_tile(L, tile_rows, Cin, Cout, xbytes, obytes)
    TLh = TL + 2 * PAD
    TS = max(8, min(sub_rows, TL))          # accumulator sub-chunk rows
    CO = min(cout_chunk, Cout)              # output-channel chunk width

    nt = -(-L // TL)                        # logical sequence tiles
    NC = 2 if nt >= 2 else 1                # "parallel" axis -> both v7x TensorCores
    TPC = -(-nt // NC)                      # tiles per core
    Lout = NC * TPC * TL                    # output rows incl. phantom/ragged pad

    # Edge tiles (statically known indices) whose halo DMA must be clipped to
    # the valid rows of x.  Only tiles 0, nt-1 (and nt-2 when the ragged
    # remainder < PAD) can clip, and each clip size is a static constant.
    special = {}
    cand = {0, nt - 1}
    if nt >= 2:
        cand.add(nt - 2)
    for t in sorted(cand):
        lo = max(0, t * TL - PAD)
        hi = min(L, t * TL + TL + PAD)
        if lo != t * TL - PAD or hi != t * TL + TL + PAD:
            special[t] = (lo, hi)
    has_generic = nt > len(special)         # any un-clipped interior tile?

    # Weight re-layout: (Cout, Cin, K) -> (K*Cin, Cout), bf16 MXU operand.
    w2 = (jnp.transpose(weight, (2, 1, 0)).reshape(K * Cin, Cout)
          .astype(jnp.bfloat16))
    b2 = bias.astype(jnp.float32).reshape(1, Cout)

    def kernel(x_hbm, w_ref, b_ref, o_ref, xbuf, sem):
        c = pl.program_id(0)                # core / parallel axis
        j = pl.program_id(1)                # sequential tile axis within a core
        t = jnp.minimum(c * TPC + j, nt - 1)   # clamp phantom tail tiles
        slot = lax.rem(j, 2)

        # ---- DMA descriptors (waits must mirror the started copies). -------
        def edge_copy(tt, sl):
            lo, hi = special[tt]
            doff = lo - (tt * TL - PAD)
            return pltpu.make_async_copy(
                x_hbm.at[pl.ds(lo, hi - lo), :],
                xbuf.at[sl, pl.ds(doff, hi - lo), :],
                sem.at[sl])

        def body_copy(tile_idx, sl):
            start = pl.multiple_of(tile_idx * TL, 8) - PAD   # TL % 8 == 0
            return pltpu.make_async_copy(
                x_hbm.at[pl.ds(start, TLh), :], xbuf.at[sl], sem.at[sl])

        def is_generic(tile_idx):
            cond = None
            for tt in special:
                ne = tile_idx != tt
                cond = ne if cond is None else jnp.logical_and(cond, ne)
            return cond

        def fetch(tile_idx, sl):
            for tt, (lo, hi) in special.items():
                @pl.when(tile_idx == tt)
                def _(tt=tt, lo=lo, hi=hi):
                    doff = lo - (tt * TL - PAD)
                    sz = hi - lo
                    if doff > 0:            # leading zero halo (<= PAD rows)
                        xbuf[sl, 0:doff, :] = jnp.zeros((doff, Cin), xdt)
                    # Only PAD rows past the copied region are ever read by
                    # valid output rows; rows beyond feed discarded outputs.
                    zend = min(TLh, doff + sz + PAD)
                    if doff + sz < zend:    # trailing zero halo (<= PAD rows)
                        xbuf[sl, doff + sz:zend, :] = jnp.zeros(
                            (zend - doff - sz, Cin), xdt)
                    edge_copy(tt, sl).start()
            if has_generic:
                @pl.when(is_generic(tile_idx))
                def _():
                    body_copy(tile_idx, sl).start()

        def wait_for(tile_idx, sl):
            for tt in special:
                @pl.when(tile_idx == tt)
                def _(tt=tt):
                    edge_copy(tt, sl).wait()
            if has_generic:
                @pl.when(is_generic(tile_idx))
                def _():
                    body_copy(tile_idx, sl).wait()

        # Prime this core's prefetch chain.
        @pl.when(j == 0)
        def _():
            fetch(t, slot)

        wait_for(t, slot)

        # Prefetch the next tile of this core while computing on this one.
        @pl.when(j + 1 < TPC)
        def _():
            t_next = jnp.minimum(c * TPC + j + 1, nt - 1)
            fetch(t_next, 1 - slot)

        xh = xbuf.at[slot]                  # ref view; rows loaded per sub-chunk

        # Per-tap accumulation (no im2col), row sub-chunks bound the f32
        # accumulator, Cout chunks keep it <= ~32 vregs at production widths.
        for r0 in range(0, TL, TS):
            rs = min(TS, TL - r0)
            for co in range(0, Cout, CO):
                cs = min(CO, Cout - co)
                acc = None
                for k in range(K):
                    xs = xh[r0 + k:r0 + k + rs, :].astype(jnp.bfloat16)
                    part = jnp.dot(xs, w_ref[k * Cin:(k + 1) * Cin, co:co + cs],
                                   preferred_element_type=jnp.float32)
                    acc = part if acc is None else acc + part
                o_ref[r0:r0 + rs, co:co + cs] = (
                    acc + b_ref[:, co:co + cs]).astype(o_ref.dtype)

    out = pl.pallas_call(
        kernel,
        out_shape=jax.ShapeDtypeStruct((Lout, Cout), out_dtype),
        grid_spec=pltpu.PrefetchScalarGridSpec(
            num_scalar_prefetch=0,
            grid=(NC, TPC),
            in_specs=[
                pl.BlockSpec(memory_space=pl.ANY),                    # x stays in HBM
                pl.BlockSpec((K * Cin, Cout), lambda c, j: (0, 0)),   # resident weights
                pl.BlockSpec((1, Cout), lambda c, j: (0, 0)),         # resident bias
            ],
            out_specs=pl.BlockSpec((TL, Cout), lambda c, j: (c * TPC + j, 0)),
            scratch_shapes=[
                pltpu.VMEM((2, TLh, Cin), x.dtype),                   # halo'd double buffer
                pltpu.SemaphoreType.DMA((2,)),
            ],
        ),
        # Leading axis "parallel" (megacore on v7x); trailing axis "arbitrary"
        # because the manual double-buffered prefetch chain is sequential
        # within a core (primed at j == 0).
        compiler_params=pltpu.CompilerParams(
            dimension_semantics=("parallel", "arbitrary"),
            vmem_limit_bytes=48 * 1024 * 1024,
        ),
    )(x, w2, b2)
    return out[:L]


def sliceconv_ref(x, weight, bias):
    """Pure-JAX f32 reference (same math as torch.nn.Conv1d with padding=2)."""
    L, Cin = x.shape
    Cout = weight.shape[0]
    x_pad = jnp.pad(x, ((PAD, PAD), (0, 0)))
    w_t = jnp.transpose(weight, (2, 1, 0))
    acc = jnp.zeros((L, Cout), jnp.float32)
    for k in range(K):
        acc = acc + x_pad[k:k + L, :].astype(jnp.float32) @ w_t[k].astype(jnp.float32)
    return (acc + bias[None, :]).astype(x.dtype)


if __name__ == "__main__":
    key = jax.random.PRNGKey(0)
    kx, kw, kb, kx2, kx3 = jax.random.split(key, 5)

    # Small shapes consistent with the module (channels scaled down from 512).
    L, Cin, Cout = 16, 128, 128
    fan_in = Cin * K
    bound = 1.0 / (fan_in ** 0.5)

    x = jax.random.normal(kx, (L, Cin), dtype=jnp.float32)
    weight = jax.random.uniform(kw, (Cout, Cin, K), minval=-bound, maxval=bound,
                                dtype=jnp.float32)
    bias = jax.random.uniform(kb, (Cout,), minval=-bound, maxval=bound,
                              dtype=jnp.float32)

    out = jax.block_until_ready(sliceconv(x, weight, bias))
    ref = sliceconv_ref(x, weight, bias)
    assert out.shape == (L, Cout)
    # bf16 MXU operands => looser tolerance vs the f32 reference.
    assert jnp.allclose(out, ref, atol=2e-2, rtol=2e-2), "mismatch (single tile)"

    # Multi-tile path: 3 logical tiles -> 2x2 grid (parallel axis, clamped
    # phantom tail tile), generic + clipped-edge DMAs, prefetch chain.
    L2 = 40
    x2 = jax.random.normal(kx2, (L2, Cin), dtype=jnp.float32)
    out2 = jax.block_until_ready(sliceconv(x2, weight, bias, tile_rows=16))
    ref2 = sliceconv_ref(x2, weight, bias)
    assert out2.shape == (L2, Cout)
    assert jnp.allclose(out2, ref2, atol=2e-2, rtol=2e-2), "mismatch (multi tile)"

    # Single big ragged tile: exercises the row sub-chunk loop and the
    # output-channel chunk loop.
    L3 = 300
    x3 = jax.random.normal(kx3, (L3, Cin), dtype=jnp.float32)
    out3 = jax.block_until_ready(sliceconv(x3, weight, bias, cout_chunk=64))
    ref3 = sliceconv_ref(x3, weight, bias)
    assert out3.shape == (L3, Cout)
    assert jnp.allclose(out3, ref3, atol=2e-2, rtol=2e-2), "mismatch (ragged tile)"

    print("KERNEL_OK")
</pallas_src>

<mosaic_0001>
module attributes {stable_mosaic.version = 11 : i64} {
  func.func @kernel(%arg0: i32, %arg1: i32, %arg2: memref<16x128xf32, #tpu.memory_space<any>>, %arg3: memref<640x128xbf16, #tpu.memory_space<vmem>>, %arg4: memref<1x128xf32, #tpu.memory_space<vmem>>, %arg5: memref<16x128xf32, #tpu.memory_space<vmem>>, %arg6: memref<2x20x128xf32, #tpu.memory_space<vmem>>, %arg7: memref<2x!tpu.dma_semaphore, #tpu.memory_space<semaphore_mem>>) attributes {dimension_semantics = [#tpu.dimension_semantics<parallel>, #tpu.dimension_semantics<arbitrary>], iteration_bounds = array<i64: 1, 1>, scalar_prefetch = 0 : i64, scratch_operands = 2 : i64, tpu.core_type = #tpu.core_type<tc>, window_params = [{}, {pipeline_mode = #tpu.pipeline_mode<synchronous>, transform_indices = @transform_1, window_bounds = array<i64: 640, 128>}, {pipeline_mode = #tpu.pipeline_mode<synchronous>, transform_indices = @transform_2, window_bounds = array<i64: 1, 128>}, {transform_indices = @transform_3, window_bounds = array<i64: 16, 128>}]} {
    %c1_i32 = arith.constant 1 : i32
    %0 = arith.muli %arg0, %c1_i32 : i32
    %1 = arith.addi %0, %arg1 : i32
    %c0_i32 = arith.constant 0 : i32
    %2 = arith.minsi %1, %c0_i32 : i32
    %c2_i32 = arith.constant 2 : i32
    %3 = arith.remsi %arg1, %c2_i32 : i32
    %c0_i32_0 = arith.constant 0 : i32
    %4 = arith.cmpi eq, %arg1, %c0_i32_0 : i32
    %5 = arith.extui %4 : i1 to i32
    %c0_i32_1 = arith.constant 0 : i32
    %6 = arith.cmpi ne, %5, %c0_i32_1 : i32
    scf.if %6 {
      %c0_i32_36 = arith.constant 0 : i32
      %52 = arith.cmpi eq, %2, %c0_i32_36 : i32
      %53 = arith.extui %52 : i1 to i32
      %c0_i32_37 = arith.constant 0 : i32
      %54 = arith.cmpi ne, %53, %c0_i32_37 : i32
      scf.if %54 {
        %cst_38 = arith.constant 0.000000e+00 : f32
        %55 = vector.broadcast %cst_38 : f32 to vector<2x128xf32>
        %56 = arith.index_cast %3 : i32 to index
        %c0_39 = arith.constant 0 : index
        %c0_40 = arith.constant 0 : index
        %57 = vector.load %arg6[%56, %c0_39, %c0_40] : memref<2x20x128xf32, #tpu.memory_space<vmem>>, vector<1x2x128xf32>
        %58 = vector.shape_cast %57 : vector<1x2x128xf32> to vector<2x128xf32>
        %59 = vector.shape_cast %55 : vector<2x128xf32> to vector<1x2x128xf32>
        tpu.vector_store %arg6[%56, %c0_39, %c0_40], %59 {strides = array<i32>} : memref<2x20x128xf32, #tpu.memory_space<vmem>>, vector<1x2x128xf32>,
        %cst_41 = arith.constant 0.000000e+00 : f32
        %60 = vector.broadcast %cst_41 : f32 to vector<2x128xf32>
        %61 = arith.index_cast %3 : i32 to index
        %c18 = arith.constant 18 : index
        %c0_42 = arith.constant 0 : index
        %62 = vector.load %arg6[%61, %c18, %c0_42] : memref<2x20x128xf32, #tpu.memory_space<vmem>>, vector<1x2x128xf32>
        %63 = vector.shape_cast %62 : vector<1x2x128xf32> to vector<2x128xf32>
        %64 = vector.shape_cast %60 : vector<2x128xf32> to vector<1x2x128xf32>
        tpu.vector_store %arg6[%61, %c18, %c0_42], %64 {strides = array<i32>} : memref<2x20x128xf32, #tpu.memory_space<vmem>>, vector<1x2x128xf32>,
        %c0_i32_43 = arith.constant 0 : i32
        %c0_i32_44 = arith.constant 0 : i32
        %65 = tpu.memref_slice %arg2[%c0_i32_43, %c0_i32_44] : memref<16x128xf32, #tpu.memory_space<any>> -> memref<16x128xf32, #tpu.memory_space<any>>
        %c2_i32_45 = arith.constant 2 : i32
        %c0_i32_46 = arith.constant 0 : i32
        %66 = tpu.memref_slice %arg6[%3, %c2_i32_45, %c0_i32_46] : memref<2x20x128xf32, #tpu.memory_space<vmem>> -> memref<1x16x128xf32, #tpu.memory_space<vmem>>
        %67 = tpu.memref_squeeze %66 : memref<1x16x128xf32, #tpu.memory_space<vmem>> -> memref<16x128xf32, #tpu.memory_space<vmem>>
        %68 = tpu.memref_slice %arg7[%3] : memref<2x!tpu.dma_semaphore, #tpu.memory_space<semaphore_mem>> -> memref<1x!tpu.dma_semaphore, #tpu.memory_space<semaphore_mem>>
        %69 = tpu.memref_squeeze %68 : memref<1x!tpu.dma_semaphore, #tpu.memory_space<semaphore_mem>> -> memref<!tpu.dma_semaphore, #tpu.memory_space<semaphore_mem>>
        tpu.enqueue_dma source(%65 : memref<16x128xf32, #tpu.memory_space<any>>) target(%67 : memref<16x128xf32, #tpu.memory_space<vmem>>) target_semaphore(%69 : memref<!tpu.dma_semaphore, #tpu.memory_space<semaphore_mem>>)
      } else {
      }
    } else {
    }
    %c0_i32_2 = arith.constant 0 : i32
    %7 = arith.cmpi eq, %2, %c0_i32_2 : i32
    %8 = arith.extui %7 : i1 to i32
    %c0_i32_3 = arith.constant 0 : i32
    %9 = arith.cmpi ne, %8, %c0_i32_3 : i32
    scf.if %9 {
      %c0_i32_36 = arith.constant 0 : i32
      %c0_i32_37 = arith.constant 0 : i32
      %52 = tpu.memref_slice %arg2[%c0_i32_36, %c0_i32_37] : memref<16x128xf32, #tpu.memory_space<any>> -> memref<16x128xf32, #tpu.memory_space<any>>
      %c2_i32_38 = arith.constant 2 : i32
      %c0_i32_39 = arith.constant 0 : i32
      %53 = tpu.memref_slice %arg6[%3, %c2_i32_38, %c0_i32_39] : memref<2x20x128xf32, #tpu.memory_space<vmem>> -> memref<1x16x128xf32, #tpu.memory_space<vmem>>
      %54 = tpu.memref_squeeze %53 : memref<1x16x128xf32, #tpu.memory_space<vmem>> -> memref<16x128xf32, #tpu.memory_space<vmem>>
      %55 = tpu.memref_slice %arg7[%3] : memref<2x!tpu.dma_semaphore, #tpu.memory_space<semaphore_mem>> -> memref<1x!tpu.dma_semaphore, #tpu.memory_space<semaphore_mem>>
      %56 = tpu.memref_squeeze %55 : memref<1x!tpu.dma_semaphore, #tpu.memory_space<semaphore_mem>> -> memref<!tpu.dma_semaphore, #tpu.memory_space<semaphore_mem>>
      tpu.wait_dma2 semaphore(%56 : memref<!tpu.dma_semaphore, #tpu.memory_space<semaphore_mem>>) src(%52 : memref<16x128xf32, #tpu.memory_space<any>>) dst(%54 : memref<16x128xf32, #tpu.memory_space<vmem>>)
    } else {
    }
    %c1_i32_4 = arith.constant 1 : i32
    %10 = arith.addi %arg1, %c1_i32_4 : i32
    %c1_i32_5 = arith.constant 1 : i32
    %11 = arith.cmpi slt, %10, %c1_i32_5 : i32
    %12 = arith.extui %11 : i1 to i32
    %c0_i32_6 = arith.constant 0 : i32
    %13 = arith.cmpi ne, %12, %c0_i32_6 : i32
    scf.if %13 {
      %c1_i32_36 = arith.constant 1 : i32
      %52 = arith.muli %arg0, %c1_i32_36 : i32
      %53 = arith.addi %52, %arg1 : i32
      %c1_i32_37 = arith.constant 1 : i32
      %54 = arith.addi %53, %c1_i32_37 : i32
      %c0_i32_38 = arith.constant 0 : i32
      %55 = arith.minsi %54, %c0_i32_38 : i32
      %c1_i32_39 = arith.constant 1 : i32
      %56 = arith.subi %c1_i32_39, %3 : i32
      %c0_i32_40 = arith.constant 0 : i32
      %57 = arith.cmpi eq, %55, %c0_i32_40 : i32
      %58 = arith.extui %57 : i1 to i32
      %c0_i32_41 = arith.constant 0 : i32
      %59 = arith.cmpi ne, %58, %c0_i32_41 : i32
      scf.if %59 {
        %cst_42 = arith.constant 0.000000e+00 : f32
        %60 = vector.broadcast %cst_42 : f32 to vector<2x128xf32>
        %61 = arith.index_cast %56 : i32 to index
        %c0_43 = arith.constant 0 : index
        %c0_44 = arith.constant 0 : index
        %62 = vector.load %arg6[%61, %c0_43, %c0_44] : memref<2x20x128xf32, #tpu.memory_space<vmem>>, vector<1x2x128xf32>
        %63 = vector.shape_cast %62 : vector<1x2x128xf32> to vector<2x128xf32>
        %64 = vector.shape_cast %60 : vector<2x128xf32> to vector<1x2x128xf32>
        tpu.vector_store %arg6[%61, %c0_43, %c0_44], %64 {strides = array<i32>} : memref<2x20x128xf32, #tpu.memory_space<vmem>>, vector<1x2x128xf32>,
        %cst_45 = arith.constant 0.000000e+00 : f32
        %65 = vector.broadcast %cst_45 : f32 to vector<2x128xf32>
        %66 = arith.index_cast %56 : i32 to index
        %c18 = arith.constant 18 : index
        %c0_46 = arith.constant 0 : index
        %67 = vector.load %arg6[%66, %c18, %c0_46] : memref<2x20x128xf32, #tpu.memory_space<vmem>>, vector<1x2x128xf32>
        %68 = vector.shape_cast %67 : vector<1x2x128xf32> to vector<2x128xf32>
        %69 = vector.shape_cast %65 : vector<2x128xf32> to vector<1x2x128xf32>
        tpu.vector_store %arg6[%66, %c18, %c0_46], %69 {strides = array<i32>} : memref<2x20x128xf32, #tpu.memory_space<vmem>>, vector<1x2x128xf32>,
        %c0_i32_47 = arith.constant 0 : i32
        %c0_i32_48 = arith.constant 0 : i32
        %70 = tpu.memref_slice %arg2[%c0_i32_47, %c0_i32_48] : memref<16x128xf32, #tpu.memory_space<any>> -> memref<16x128xf32, #tpu.memory_space<any>>
        %c2_i32_49 = arith.constant 2 : i32
        %c0_i32_50 = arith.constant 0 : i32
        %71 = tpu.memref_slice %arg6[%56, %c2_i32_49, %c0_i32_50] : memref<2x20x128xf32, #tpu.memory_space<vmem>> -> memref<1x16x128xf32, #tpu.memory_space<vmem>>
        %72 = tpu.memref_squeeze %71 : memref<1x16x128xf32, #tpu.memory_space<vmem>> -> memref<16x128xf32, #tpu.memory_space<vmem>>
        %73 = tpu.memref_slice %arg7[%56] : memref<2x!tpu.dma_semaphore, #tpu.memory_space<semaphore_mem>> -> memref<1x!tpu.dma_semaphore, #tpu.memory_space<semaphore_mem>>
        %74 = tpu.memref_squeeze %73 : memref<1x!tpu.dma_semaphore, #tpu.memory_space<semaphore_mem>> -> memref<!tpu.dma_semaphore, #tpu.memory_space<semaphore_mem>>
        tpu.enqueue_dma source(%70 : memref<16x128xf32, #tpu.memory_space<any>>) target(%72 : memref<16x128xf32, #tpu.memory_space<vmem>>) target_semaphore(%74 : memref<!tpu.dma_semaphore, #tpu.memory_space<semaphore_mem>>)
      } else {
      }
    } else {
    }
    %c0_i32_7 = arith.constant 0 : i32
    %c0_i32_8 = arith.constant 0 : i32
    %14 = tpu.memref_slice %arg6[%3, %c0_i32_7, %c0_i32_8] : memref<2x20x128xf32, #tpu.memory_space<vmem>> -> memref<1x20x128xf32, #tpu.memory_space<vmem>>
    %15 = tpu.memref_squeeze %14 : memref<1x20x128xf32, #tpu.memory_space<vmem>> -> memref<20x128xf32, #tpu.memory_space<vmem>>
    %c0 = arith.constant 0 : index
    %c0_9 = arith.constant 0 : index
    %16 = vector.load %15[%c0, %c0_9] : memref<20x128xf32, #tpu.memory_space<vmem>>, vector<16x128xf32>
    %17 = arith.truncf %16 : vector<16x128xf32> to vector<16x128xbf16>
    %c0_10 = arith.constant 0 : index
    %c0_11 = arith.constant 0 : index
    %18 = vector.load %arg3[%c0_10, %c0_11] : memref<640x128xbf16, #tpu.memory_space<vmem>>, vector<128x128xbf16>
    %cst = arith.constant dense<0.000000e+00> : vector<16x128xf32>
    %19 = tpu.matmul %17, %18, %cst {dimension_numbers = #tpu.dot_dimension_numbers<[1], [0], [0], [1], [0, 0, 1, 1], [], []>} : vector<16x128xbf16>, vector<128x128xbf16>, vector<16x128xf32> -> vector<16x128xf32>
    %c0_i32_12 = arith.constant 0 : i32
    %c0_i32_13 = arith.constant 0 : i32
    %20 = tpu.memref_slice %arg6[%3, %c0_i32_12, %c0_i32_13] : memref<2x20x128xf32, #tpu.memory_space<vmem>> -> memref<1x20x128xf32, #tpu.memory_space<vmem>>
    %21 = tpu.memref_squeeze %20 : memref<1x20x128xf32, #tpu.memory_space<vmem>> -> memref<20x128xf32, #tpu.memory_space<vmem>>
    %c1 = arith.constant 1 : index
    %c0_14 = arith.constant 0 : index
    %22 = vector.load %21[%c1, %c0_14] : memref<20x128xf32, #tpu.memory_space<vmem>>, vector<16x128xf32>
    %23 = arith.truncf %22 : vector<16x128xf32> to vector<16x128xbf16>
    %c128 = arith.constant 128 : index
    %c0_15 = arith.constant 0 : index
    %24 = vector.load %arg3[%c128, %c0_15] : memref<640x128xbf16, #tpu.memory_space<vmem>>, vector<128x128xbf16>
    %cst_16 = arith.constant dense<0.000000e+00> : vector<16x128xf32>
    %25 = tpu.matmul %23, %24, %cst_16 {dimension_numbers = #tpu.dot_dimension_numbers<[1], [0], [0], [1], [0, 0, 1, 1], [], []>} : vector<16x128xbf16>, vector<128x128xbf16>, vector<16x128xf32> -> vector<16x128xf32>
    %26 = arith.addf %19, %25 : vector<16x128xf32>
    %c0_i32_17 = arith.constant 0 : i32
    %c0_i32_18 = arith.constant 0 : i32
    %27 = tpu.memref_slice %arg6[%3, %c0_i32_17, %c0_i32_18] : memref<2x20x128xf32, #tpu.memory_space<vmem>> -> memref<1x20x128xf32, #tpu.memory_space<vmem>>
    %28 = tpu.memref_squeeze %27 : memref<1x20x128xf32, #tpu.memory_space<vmem>> -> memref<20x128xf32, #tpu.memory_space<vmem>>
    %c2 = arith.constant 2 : index
    %c0_19 = arith.constant 0 : index
    %29 = vector.load %28[%c2, %c0_19] : memref<20x128xf32, #tpu.memory_space<vmem>>, vector<16x128xf32>
    %30 = arith.truncf %29 : vector<16x128xf32> to vector<16x128xbf16>
    %c256 = arith.constant 256 : index
    %c0_20 = arith.constant 0 : index
    %31 = vector.load %arg3[%c256, %c0_20] : memref<640x128xbf16, #tpu.memory_space<vmem>>, vector<128x128xbf16>
    %cst_21 = arith.constant dense<0.000000e+00> : vector<16x128xf32>
    %32 = tpu.matmul %30, %31, %cst_21 {dimension_numbers = #tpu.dot_dimension_numbers<[1], [0], [0], [1], [0, 0, 1, 1], [], []>} : vector<16x128xbf16>, vector<128x128xbf16>, vector<16x128xf32> -> vector<16x128xf32>
    %33 = arith.addf %26, %32 : vector<16x128xf32>
    %c0_i32_22 = arith.constant 0 : i32
    %c0_i32_23 = arith.constant 0 : i32
    %34 = tpu.memref_slice %arg6[%3, %c0_i32_22, %c0_i32_23] : memref<2x20x128xf32, #tpu.memory_space<vmem>> -> memref<1x20x128xf32, #tpu.memory_space<vmem>>
    %35 = tpu.memref_squeeze %34 : memref<1x20x128xf32, #tpu.memory_space<vmem>> -> memref<20x128xf32, #tpu.memory_space<vmem>>
    %c3 = arith.constant 3 : index
    %c0_24 = arith.constant 0 : index
    %36 = vector.load %35[%c3, %c0_24] : memref<20x128xf32, #tpu.memory_space<vmem>>, vector<16x128xf32>
    %37 = arith.truncf %36 : vector<16x128xf32> to vector<16x128xbf16>
    %c384 = arith.constant 384 : index
    %c0_25 = arith.constant 0 : index
    %38 = vector.load %arg3[%c384, %c0_25] : memref<640x128xbf16, #tpu.memory_space<vmem>>, vector<128x128xbf16>
    %cst_26 = arith.constant dense<0.000000e+00> : vector<16x128xf32>
    %39 = tpu.matmul %37, %38, %cst_26 {dimension_numbers = #tpu.dot_dimension_numbers<[1], [0], [0], [1], [0, 0, 1, 1], [], []>} : vector<16x128xbf16>, vector<128x128xbf16>, vector<16x128xf32> -> vector<16x128xf32>
    %40 = arith.addf %33, %39 : vector<16x128xf32>
    %c0_i32_27 = arith.constant 0 : i32
    %c0_i32_28 = arith.constant 0 : i32
    %41 = tpu.memref_slice %arg6[%3, %c0_i32_27, %c0_i32_28] : memref<2x20x128xf32, #tpu.memory_space<vmem>> -> memref<1x20x128xf32, #tpu.memory_space<vmem>>
    %42 = tpu.memref_squeeze %41 : memref<1x20x128xf32, #tpu.memory_space<vmem>> -> memref<20x128xf32, #tpu.memory_space<vmem>>
    %c4 = arith.constant 4 : index
    %c0_29 = arith.constant 0 : index
    %43 = vector.load %42[%c4, %c0_29] : memref<20x128xf32, #tpu.memory_space<vmem>>, vector<16x128xf32>
    %44 = arith.truncf %43 : vector<16x128xf32> to vector<16x128xbf16>
    %c512 = arith.constant 512 : index
    %c0_30 = arith.constant 0 : index
    %45 = vector.load %arg3[%c512, %c0_30] : memref<640x128xbf16, #tpu.memory_space<vmem>>, vector<128x128xbf16>
    %cst_31 = arith.constant dense<0.000000e+00> : vector<16x128xf32>
    %46 = tpu.matmul %44, %45, %cst_31 {dimension_numbers = #tpu.dot_dimension_numbers<[1], [0], [0], [1], [0, 0, 1, 1], [], []>} : vector<16x128xbf16>, vector<128x128xbf16>, vector<16x128xf32> -> vector<16x128xf32>
    %47 = arith.addf %40, %46 : vector<16x128xf32>
    %c0_32 = arith.constant 0 : index
    %c0_33 = arith.constant 0 : index
    %48 = vector.load %arg4[%c0_32, %c0_33] : memref<1x128xf32, #tpu.memory_space<vmem>>, vector<1x128xf32>
    %49 = vector.broadcast %48 : vector<1x128xf32> to vector<16x128xf32>
    %50 = arith.addf %47, %49 : vector<16x128xf32>
    %c0_34 = arith.constant 0 : index
    %c0_35 = arith.constant 0 : index
    %51 = vector.load %arg5[%c0_34, %c0_35] : memref<16x128xf32, #tpu.memory_space<vmem>>, vector<16x128xf32>
    tpu.vector_store %arg5[%c0_34, %c0_35], %50 {strides = array<i32>} : memref<16x128xf32, #tpu.memory_space<vmem>>, vector<16x128xf32>,
    return
  }
  func.func @transform_1(%arg0: i32, %arg1: i32) -> (i32, i32) {
    %c0_i32 = arith.constant 0 : i32
    %c0_i32_0 = arith.constant 0 : i32
    %c0_i32_1 = arith.constant 0 : i32
    return %c0_i32, %c0_i32_0 : i32, i32
  }
  func.func @transform_2(%arg0: i32, %arg1: i32) -> (i32, i32) {
    %c0_i32 = arith.constant 0 : i32
    %c0_i32_0 = arith.constant 0 : i32
    %c0_i32_1 = arith.constant 0 : i32
    return %c0_i32, %c0_i32_0 : i32, i32
  }
  func.func @transform_3(%arg0: i32, %arg1: i32) -> (i32, i32) {
    %c1_i32 = arith.constant 1 : i32
    %0 = arith.muli %arg0, %c1_i32 : i32
    %1 = arith.addi %0, %arg1 : i32
    %c0_i32 = arith.constant 0 : i32
    %c0_i32_0 = arith.constant 0 : i32
    return %1, %c0_i32 : i32, i32
  }
}

</mosaic_0001>

<llo_original>
// kernel: tpu_custom_call.1
$region0: #{tpu_custom_call.1}
  #allocation0 [shape = 'u32[]', space=smem, size = 0x4, offset = 0x4, fixed_abs, tag = 'smem constant byte address 0x4 - core index']
  #allocation1 [shape = 'u32[144,128]{1,0:T(1,128)}', space=vmem, size = 0x12000, scoped, tag = 'internal scratch']
  #allocation2 [shape = 'f32[2,20,128]{2,1,0:T(8,128)}', space=vmem, size = 0x6000, scoped, tag = 'scratch operand']
  #allocation3 [shape = 's32[2]{0}', space=sflag, size = 0x8, scoped, tag = 'scratch operand']
  #allocation8 [shape = 's32[]', space=sflag, size = 0x4, offset = 0, fixed_abs, tag = 'sflag constant byte address 0x0 - dummy sync flag']
  #allocation9 [shape = 's32[]', space=sflag, size = 0x4, offset = 0, fixed_abs, tag = 'sflag constant byte address 0x0 - dummy sync flag']
  #allocation10 [shape = 'u32[]', space=smem, size = 0x4, offset = 0x44, fixed_abs, tag = 'smem constant byte address 0x44 - assertion arg 0']
  #allocation11 [shape = 'u32[]', space=smem, size = 0x4, offset = 0x48, fixed_abs, tag = 'smem constant byte address 0x48 - assertion arg 1']
  #allocation12 [shape = 's32[]', space=sflag, size = 0x4, offset = 0, fixed_abs, tag = 'sflag constant byte address 0x0 - dummy sync flag']
  #allocation13 [shape = 's32[]', space=sflag, size = 0x4, offset = 0, fixed_abs, tag = 'sflag constant byte address 0x0 - dummy sync flag']
  %s0 = inlined_call_operand.hbm [shape: f32[16,128], index: 0, kind: input, shape index: {}]
  %s1 = inlined_call_operand.hbm [shape: bf16[640,128], index: 1, kind: input, shape index: {}]
  %s2 = inlined_call_operand.vmem [shape: f32[1,128], index: 2, kind: input, shape index: {}]
  %s3 = inlined_call_operand.hbm [shape: f32[16,128], index: 3, kind: output, shape index: {}]
  %s4 = sld [smem:[#allocation0]]
  $region50: #{tpu_custom_call.1} parent=0
    _
  %s6 = ssub.s32 1, %s4
  %s7 = scalar_select 0, %s6, %s4
  $region1: #{tpu_custom_call.1} parent=0
    #allocation4 [shape = 'u8[163840]{0}', space=vmem, size = 0x28000, scoped, tag = 'input window, operand 1, single buffered']
    #allocation5 [shape = 's32[1]{0}', space=sflag, size = 0x4, scoped, tag = 'scoped memory for tpu_custom_call.1']
    #allocation6 [shape = 's32[1]{0}', space=sflag, size = 0x4, scoped, tag = 'scoped memory for tpu_custom_call.1']
    #allocation7 [shape = 'u8[8192]{0}', space=vmem, size = 0x2000, scoped, tag = 'output window, operand 0, single buffered']
    %8 = vsyncpa [#allocation5], 0
    %9 = vsyncpa [#allocation6], 0
    // Predicated region
    $region2: #{tpu_custom_call.1} parent=1 // pred_check
      _
    $region3: #{tpu_custom_call.1} parent=1 // pred_check_branch
      %11 = sbr.rel (0) target = $region5
    $region4: #{tpu_custom_call.1} parent=1 // pred_region
      %s13 = ssub.s32 5120, 5120
      %14 = vsyncadd [#allocation5], %s13
      %s15 = sshll.u32 [#allocation4], 4
      %s16 = int_to_ptr.vmem [resolvable:$true] %s15
      %21 = dma.hbm_to_vmem [thread:$0]  %s1, 5120, %s16, [#allocation5], 64, 64, 4
    $region5: #{tpu_custom_call.1} parent=1 // pred_fallthru
      _
    // Predicated region
    $region6: #{tpu_custom_call.1} parent=1 // pred_check
      _
    $region7: #{tpu_custom_call.1} parent=1 // pred_check_branch
      %23 = sbr.rel (0) target = $region9
    $region8: #{tpu_custom_call.1} parent=1 // pred_region
      _
    $region9: #{tpu_custom_call.1} parent=1 // pred_fallthru
      _
    // Predicated region
    $region10: #{tpu_custom_call.1} parent=1 // pred_check
      _
    $region11: #{tpu_custom_call.1} parent=1 // pred_check_branch
      %25 = sbr.rel (0) target = $region13
    $region12: #{tpu_custom_call.1} parent=1 // pred_region
      %26 = dma.done [#allocation5], 5120
    $region13: #{tpu_custom_call.1} parent=1 // pred_fallthru
      _
    %s27 = sadd.s32 0, 0
    %s28 = smul.u32 2, %s27
    %s30 = sadd.s32 0, 0
    %p31 = scmp.lt.s32.totalorder %s30, 0
    %s32 = scalar_select %p31, %s30, 0
    %s33 = ssub.s32 0, 0
    %s34 = ssub.s32 0, 0
    %p35 = scmp.eq.s32.totalorder 0, 0
    // Predicated region
    $region14: #{tpu_custom_call.1} parent=1 // pred_check
      %p36 = pneg %p35
    $region15: #{tpu_custom_call.1} parent=1 // pred_check_branch
      %38 = sbr.rel (%p36) target = $region17
    $region16: #{tpu_custom_call.1} parent=1 // pred_region
      %p39 = scmp.eq.s32.totalorder %s32, 0
      // Predicated region
      $region18: #{tpu_custom_call.1} parent=16 // pred_check
        %p40 = pneg %p39
      $region19: #{tpu_custom_call.1} parent=16 // pred_check_branch
        %42 = sbr.rel (%p40) target = $region21
      $region20: #{tpu_custom_call.1} parent=16 // pred_region
        %s43 = smul.u32 0, 24
        %s44 = scalar_lea.vmem [#allocation2], %s43
        %45 = vst [vmem:[%s44] sm:$0x3] 0.0
        %46 = vst [vmem:[%s44 + $0x12] sm:$0x3] 0.0
        %s47 = sadd.s32 2, %s43
        %s48 = scalar_lea.vmem [#allocation2], %s47
        // Predicated region
        $region22: #{tpu_custom_call.1} parent=20 // pred_check
          _
        $region23: #{tpu_custom_call.1} parent=20 // pred_check_branch
          %50 = sbr.rel target = $region25
        $region24: #{tpu_custom_call.1} parent=20 // pred_region
          %51 = sst [smem:[#allocation10]] [#allocation9]
          %52 = sst [smem:[#allocation11]] [#allocation8]
        $region25: #{tpu_custom_call.1} parent=20 // pred_fallthru
          _
        %54 = shalt.err (0)
        %s56 = sshll.u32 %s48, 4
        %s57 = int_to_ptr.vmem [resolvable:$true] %s56
        %59 = dma.hbm_to_vmem [thread:$0]  %s0, 256, %s57, [#allocation3]
      $region21: #{tpu_custom_call.1} parent=16 // pred_fallthru
        _
    $region17: #{tpu_custom_call.1} parent=1 // pred_fallthru
      _
    %p60 = scmp.eq.s32.totalorder %s32, 0
    // Predicated region
    $region26: #{tpu_custom_call.1} parent=1 // pred_check
      %p61 = pneg %p60
    $region27: #{tpu_custom_call.1} parent=1 // pred_check_branch
      %63 = sbr.rel (%p61) target = $region29
    $region28: #{tpu_custom_call.1} parent=1 // pred_region
      %s64 = smul.u32 16, 1
      %s65 = sshll.u32 %s64, 4
      %66 = dma.done [#allocation3], %s65
    $region29: #{tpu_custom_call.1} parent=1 // pred_fallthru
      _
    %s67 = sadd.s32 0, 1
    %p68 = scmp.lt.s32.totalorder %s67, 1
    // Predicated region
    $region30: #{tpu_custom_call.1} parent=1 // pred_check
      %p69 = pneg %p68
    $region31: #{tpu_custom_call.1} parent=1 // pred_check_branch
      %71 = sbr.rel (%p69) target = $region33
    $region32: #{tpu_custom_call.1} parent=1 // pred_region
      %s72 = sadd.s32 %s30, 1
      %p73 = scmp.lt.s32.totalorder %s72, 0
      %s74 = scalar_select %p73, %s72, 0
      %s75 = ssub.s32 1, 0
      %p76 = scmp.eq.s32.totalorder %s74, 0
      // Predicated region
      $region34: #{tpu_custom_call.1} parent=32 // pred_check
        %p77 = pneg %p76
      $region35: #{tpu_custom_call.1} parent=32 // pred_check_branch
        %79 = sbr.rel (%p77) target = $region37
      $region36: #{tpu_custom_call.1} parent=32 // pred_region
        %s80 = smul.u32 %s75, 24
        %s81 = scalar_lea.vmem [#allocation2], %s80
        %82 = vst [vmem:[%s81] sm:$0x3] 0.0
        %83 = vst [vmem:[%s81 + $0x12] sm:$0x3] 0.0
        %s84 = sadd.s32 2, %s80
        %s85 = scalar_lea.vmem [#allocation2], %s84
        %s86 = scalar_lea.sflag [#allocation3], %s75
        // Predicated region
        $region38: #{tpu_custom_call.1} parent=36 // pred_check
          _
        $region39: #{tpu_custom_call.1} parent=36 // pred_check_branch
          %88 = sbr.rel target = $region41
        $region40: #{tpu_custom_call.1} parent=36 // pred_region
          %89 = sst [smem:[#allocation10]] [#allocation13]
          %90 = sst [smem:[#allocation11]] [#allocation12]
        $region41: #{tpu_custom_call.1} parent=36 // pred_fallthru
          _
        %92 = shalt.err (0)
        %s94 = sshll.u32 %s85, 4
        %s95 = int_to_ptr.vmem [resolvable:$true] %s94
        %97 = dma.hbm_to_vmem [thread:$0]  %s0, 256, %s95, %s86
      $region37: #{tpu_custom_call.1} parent=32 // pred_fallthru
        _
    $region33: #{tpu_custom_call.1} parent=1 // pred_fallthru
      _
    %s98 = smul.u32 0, 24
    %s99 = scalar_lea.vmem [#allocation2], %s98
    %v100 = vld [vmem:[%s99] sm:$0xff]
    %v101 = vld [vmem:[%s99 + $0x8] sm:$0xff]
    %v102 = vpack.c.bf16 %v101, %v100
    %v103 = vld [vmem:[#allocation4] sm:$0xf]
    %v104 = vld [vmem:[#allocation4 + $0x4] sm:$0xf]
    %v105 = vld [vmem:[#allocation4 + $0x8] sm:$0xf]
    %v106 = vld [vmem:[#allocation4 + $0xc] sm:$0xf]
    %v107 = vld [vmem:[#allocation4 + $0x10] sm:$0xf]
    %v108 = vld [vmem:[#allocation4 + $0x14] sm:$0xf]
    %v109 = vld [vmem:[#allocation4 + $0x18] sm:$0xf]
    %v110 = vld [vmem:[#allocation4 + $0x1c] sm:$0xf]
    %v111 = vld [vmem:[#allocation4 + $0x20] sm:$0xf]
    %v112 = vld [vmem:[#allocation4 + $0x24] sm:$0xf]
    %v113 = vld [vmem:[#allocation4 + $0x28] sm:$0xf]
    %v114 = vld [vmem:[#allocation4 + $0x2c] sm:$0xf]
    %v115 = vld [vmem:[#allocation4 + $0x30] sm:$0xf]
    %v116 = vld [vmem:[#allocation4 + $0x34] sm:$0xf]
    %v117 = vld [vmem:[#allocation4 + $0x38] sm:$0xf]
    %v118 = vld [vmem:[#allocation4 + $0x3c] sm:$0xf]
    %v119 = vld [vmem:[%s99 + $0x1] sm:$0xff]
    %v120 = vld [vmem:[%s99 + $0x9] sm:$0xff]
    %v121 = vpack.c.bf16 %v120, %v119
    %v122 = vld [vmem:[#allocation4 + $0x40] sm:$0xf]
    %v123 = vld [vmem:[#allocation4 + $0x44] sm:$0xf]
    %v124 = vld [vmem:[#allocation4 + $0x48] sm:$0xf]
    %v125 = vld [vmem:[#allocation4 + $0x4c] sm:$0xf]
    %v126 = vld [vmem:[#allocation4 + $0x50] sm:$0xf]
    %v127 = vld [vmem:[#allocation4 + $0x54] sm:$0xf]
    %v128 = vld [vmem:[#allocation4 + $0x58] sm:$0xf]
    %v129 = vld [vmem:[#allocation4 + $0x5c] sm:$0xf]
    %v130 = vld [vmem:[#allocation4 + $0x60] sm:$0xf]
    %v131 = vld [vmem:[#allocation4 + $0x64] sm:$0xf]
    %v132 = vld [vmem:[#allocation4 + $0x68] sm:$0xf]
    %v133 = vld [vmem:[#allocation4 + $0x6c] sm:$0xf]
    %v134 = vld [vmem:[#allocation4 + $0x70] sm:$0xf]
    %v135 = vld [vmem:[#allocation4 + $0x74] sm:$0xf]
    %v136 = vld [vmem:[#allocation4 + $0x78] sm:$0xf]
    %v137 = vld [vmem:[#allocation4 + $0x7c] sm:$0xf]
    %v154 = vunpack.c.l.b16 %v122
    %v155 = vunpack.c.l.b16 %v123
    %v156 = vunpack.c.l.b16 %v124
    %v157 = vunpack.c.l.b16 %v125
    %v158 = vunpack.c.l.b16 %v126
    %v159 = vunpack.c.l.b16 %v127
    %v160 = vunpack.c.l.b16 %v128
    %v161 = vunpack.c.l.b16 %v129
    %v162 = vunpack.c.l.b16 %v130
    %v163 = vunpack.c.l.b16 %v131
    %v164 = vunpack.c.l.b16 %v132
    %v165 = vunpack.c.l.b16 %v133
    %v166 = vunpack.c.l.b16 %v134
    %v167 = vunpack.c.l.b16 %v135
    %v168 = vunpack.c.l.b16 %v136
    %v169 = vunpack.c.l.b16 %v137
    %v170 = vpack.c.b16 %v155, %v154
    %v171 = vpack.c.b16 %v157, %v156
    %v172 = vpack.c.b16 %v159, %v158
    %v173 = vpack.c.b16 %v161, %v160
    %v174 = vpack.c.b16 %v163, %v162
    %v175 = vpack.c.b16 %v165, %v164
    %v176 = vpack.c.b16 %v167, %v166
    %v177 = vpack.c.b16 %v169, %v168
    %186 = vmatprep.subr.bf16.mxu0 0
    %187 = vmatpush1.bf16.msra.mxu0 %v177
    %188 = vmatprep.subr.bf16.mxu0 0
    %189 = vmatpush1.bf16.msra.mxu0 %v176
    %190 = vmatprep.subr.bf16.mxu0 0
    %191 = vmatpush1.bf16.msra.mxu0 %v175
    %192 = vmatprep.subr.bf16.mxu0 0
    %193 = vmatpush1.bf16.msra.mxu0 %v174
    %194 = vmatprep.subr.bf16.mxu0 0
    %195 = vmatpush1.bf16.msra.mxu0 %v173
    %196 = vmatprep.subr.bf16.mxu0 0
    %197 = vmatpush1.bf16.msra.mxu0 %v172
    %198 = vmatprep.subr.bf16.mxu0 0
    %199 = vmatpush1.bf16.msra.mxu0 %v171
    %200 = vmatprep.subr.bf16.mxu0 0
    %201 = vmatpush1.bf16.msra.mxu0 %v170
    %202 = vmatprep.subr.bf16.mxu0 0
    %203 = vmatpush2.bf16.msra.mxu0 0
    %204 = vmatprep.subr.bf16.mxu0 0
    %205 = vmatpush2.bf16.msra.mxu0 0
    %206 = vmatprep.subr.bf16.mxu0 0
    %207 = vmatpush2.bf16.msra.mxu0 0
    %208 = vmatprep.subr.bf16.mxu0 0
    %209 = vmatpush2.bf16.msra.mxu0 0
    %210 = vmatprep.subr.bf16.mxu0 0
    %211 = vmatpush2.bf16.msra.mxu0 0
    %212 = vmatprep.subr.bf16.mxu0 0
    %213 = vmatpush2.bf16.msra.mxu0 0
    %214 = vmatprep.subr.bf16.mxu0 0
    %215 = vmatpush2.bf16.msra.mxu0 0
    %216 = vmatprep.subr.bf16.mxu0 0
    %217 = vmatpush2.bf16.msra.mxu0 0
    %218 = vmatprep.mubr.bf16.mxu0 0
    %219 = vmatmul.mubr.bf16.gmra.mxu0 %v121
    %v220 = vpop.f32.mrf.mxu0
    %v221 = vadd.f32 0.0, %v220
    %v222 = vpop.f32.mrf.mxu0
    %v223 = vpop.f32.mrf.mxu0
    %v224 = vadd.f32 0.0, %v223
    %v225 = vpop.f32.mrf.mxu0
    %226 = vdwg.mxu0
    %v243 = vunpack.c.l.b16 %v103
    %v244 = vunpack.c.l.b16 %v104
    %v245 = vunpack.c.l.b16 %v105
    %v246 = vunpack.c.l.b16 %v106
    %v247 = vunpack.c.l.b16 %v107
    %v248 = vunpack.c.l.b16 %v108
    %v249 = vunpack.c.l.b16 %v109
    %v250 = vunpack.c.l.b16 %v110
    %v251 = vunpack.c.l.b16 %v111
    %v252 = vunpack.c.l.b16 %v112
    %v253 = vunpack.c.l.b16 %v113
    %v254 = vunpack.c.l.b16 %v114
    %v255 = vunpack.c.l.b16 %v115
    %v256 = vunpack.c.l.b16 %v116
    %v257 = vunpack.c.l.b16 %v117
    %v258 = vunpack.c.l.b16 %v118
    %v259 = vpack.c.b16 %v244, %v243
    %v260 = vpack.c.b16 %v246, %v245
    %v261 = vpack.c.b16 %v248, %v247
    %v262 = vpack.c.b16 %v250, %v249
    %v263 = vpack.c.b16 %v252, %v251
    %v264 = vpack.c.b16 %v254, %v253
    %v265 = vpack.c.b16 %v256, %v255
    %v266 = vpack.c.b16 %v258, %v257
    %275 = vmatprep.subr.bf16.mxu0 0
    %276 = vmatpush1.bf16.msra.mxu0 %v266
    %277 = vmatprep.subr.bf16.mxu0 0
    %278 = vmatpush1.bf16.msra.mxu0 %v265
    %279 = vmatprep.subr.bf16.mxu0 0
    %280 = vmatpush1.bf16.msra.mxu0 %v264
    %281 = vmatprep.subr.bf16.mxu0 0
    %282 = vmatpush1.bf16.msra.mxu0 %v263
    %283 = vmatprep.subr.bf16.mxu0 0
    %284 = vmatpush1.bf16.msra.mxu0 %v262
    %285 = vmatprep.subr.bf16.mxu0 0
    %286 = vmatpush1.bf16.msra.mxu0 %v261
    %287 = vmatprep.subr.bf16.mxu0 0
    %288 = vmatpush1.bf16.msra.mxu0 %v260
    %289 = vmatprep.subr.bf16.mxu0 0
    %290 = vmatpush1.bf16.msra.mxu0 %v259
    %291 = vmatprep.subr.bf16.mxu0 0
    %292 = vmatpush2.bf16.msra.mxu0 0
    %293 = vmatprep.subr.bf16.mxu0 0
    %294 = vmatpush2.bf16.msra.mxu0 0
    %295 = vmatprep.subr.bf16.mxu0 0
    %296 = vmatpush2.bf16.msra.mxu0 0
    %297 = vmatprep.subr.bf16.mxu0 0
    %298 = vmatpush2.bf16.msra.mxu0 0
    %299 = vmatprep.subr.bf16.mxu0 0
    %300 = vmatpush2.bf16.msra.mxu0 0
    %301 = vmatprep.subr.bf16.mxu0 0
    %302 = vmatpush2.bf16.msra.mxu0 0
    %303 = vmatprep.subr.bf16.mxu0 0
    %304 = vmatpush2.bf16.msra.mxu0 0
    %305 = vmatprep.subr.bf16.mxu0 0
    %306 = vmatpush2.bf16.msra.mxu0 0
    %307 = vmatprep.mubr.bf16.mxu0 0
    %308 = vmatmul.mubr.bf16.gmra.mxu0 %v102
    %v309 = vpop.f32.mrf.mxu0
    %v310 = vadd.f32 %v221, %v309
    %v311 = vpop.f32.mrf.mxu0
    %v312 = vpop.f32.mrf.mxu0
    %v313 = vadd.f32 %v224, %v312
    %v314 = vpop.f32.mrf.mxu0
    %315 = vdwg.mxu0
    %v316 = vld [vmem:[%s99 + $0x2] sm:$0xff]
    %v317 = vld [vmem:[%s99 + $0xa] sm:$0xff]
    %v318 = vpack.c.bf16 %v317, %v316
    %v319 = vld [vmem:[#allocation4 + $0x80] sm:$0xf]
    %v320 = vld [vmem:[#allocation4 + $0x84] sm:$0xf]
    %v321 = vld [vmem:[#allocation4 + $0x88] sm:$0xf]
    %v322 = vld [vmem:[#allocation4 + $0x8c] sm:$0xf]
    %v323 = vld [vmem:[#allocation4 + $0x90] sm:$0xf]
    %v324 = vld [vmem:[#allocation4 + $0x94] sm:$0xf]
    %v325 = vld [vmem:[#allocation4 + $0x98] sm:$0xf]
    %v326 = vld [vmem:[#allocation4 + $0x9c] sm:$0xf]
    %v327 = vld [vmem:[#allocation4 + $0xa0] sm:$0xf]
    %v328 = vld [vmem:[#allocation4 + $0xa4] sm:$0xf]
    %v329 = vld [vmem:[#allocation4 + $0xa8] sm:$0xf]
    %v330 = vld [vmem:[#allocation4 + $0xac] sm:$0xf]
    %v331 = vld [vmem:[#allocation4 + $0xb0] sm:$0xf]
    %v332 = vld [vmem:[#allocation4 + $0xb4] sm:$0xf]
    %v333 = vld [vmem:[#allocation4 + $0xb8] sm:$0xf]
    %v334 = vld [vmem:[#allocation4 + $0xbc] sm:$0xf]
    %v351 = vunpack.c.l.b16 %v319
    %v352 = vunpack.c.l.b16 %v320
    %v353 = vunpack.c.l.b16 %v321
    %v354 = vunpack.c.l.b16 %v322
    %v355 = vunpack.c.l.b16 %v323
    %v356 = vunpack.c.l.b16 %v324
    %v357 = vunpack.c.l.b16 %v325
    %v358 = vunpack.c.l.b16 %v326
    %v359 = vunpack.c.l.b16 %v327
    %v360 = vunpack.c.l.b16 %v328
    %v361 = vunpack.c.l.b16 %v329
    %v362 = vunpack.c.l.b16 %v330
    %v363 = vunpack.c.l.b16 %v331
    %v364 = vunpack.c.l.b16 %v332
    %v365 = vunpack.c.l.b16 %v333
    %v366 = vunpack.c.l.b16 %v334
    %v367 = vpack.c.b16 %v352, %v351
    %v368 = vpack.c.b16 %v354, %v353
    %v369 = vpack.c.b16 %v356, %v355
    %v370 = vpack.c.b16 %v358, %v357
    %v371 = vpack.c.b16 %v360, %v359
    %v372 = vpack.c.b16 %v362, %v361
    %v373 = vpack.c.b16 %v364, %v363
    %v374 = vpack.c.b16 %v366, %v365
    %383 = vmatprep.subr.bf16.mxu0 0
    %384 = vmatpush1.bf16.msra.mxu0 %v374
    %385 = vmatprep.subr.bf16.mxu0 0
    %386 = vmatpush1.bf16.msra.mxu0 %v373
    %387 = vmatprep.subr.bf16.mxu0 0
    %388 = vmatpush1.bf16.msra.mxu0 %v372
    %389 = vmatprep.subr.bf16.mxu0 0
    %390 = vmatpush1.bf16.msra.mxu0 %v371
    %391 = vmatprep.subr.bf16.mxu0 0
    %392 = vmatpush1.bf16.msra.mxu0 %v370
    %393 = vmatprep.subr.bf16.mxu0 0
    %394 = vmatpush1.bf16.msra.mxu0 %v369
    %395 = vmatprep.subr.bf16.mxu0 0
    %396 = vmatpush1.bf16.msra.mxu0 %v368
    %397 = vmatprep.subr.bf16.mxu0 0
    %398 = vmatpush1.bf16.msra.mxu0 %v367
    %399 = vmatprep.subr.bf16.mxu0 0
    %400 = vmatpush2.bf16.msra.mxu0 0
    %401 = vmatprep.subr.bf16.mxu0 0
    %402 = vmatpush2.bf16.msra.mxu0 0
    %403 = vmatprep.subr.bf16.mxu0 0
    %404 = vmatpush2.bf16.msra.mxu0 0
    %405 = vmatprep.subr.bf16.mxu0 0
    %406 = vmatpush2.bf16.msra.mxu0 0
    %407 = vmatprep.subr.bf16.mxu0 0
    %408 = vmatpush2.bf16.msra.mxu0 0
    %409 = vmatprep.subr.bf16.mxu0 0
    %410 = vmatpush2.bf16.msra.mxu0 0
    %411 = vmatprep.subr.bf16.mxu0 0
    %412 = vmatpush2.bf16.msra.mxu0 0
    %413 = vmatprep.subr.bf16.mxu0 0
    %414 = vmatpush2.bf16.msra.mxu0 0
    %415 = vmatprep.mubr.bf16.mxu0 0
    %416 = vmatmul.mubr.bf16.gmra.mxu0 %v318
    %v417 = vpop.f32.mrf.mxu0
    %v418 = vadd.f32 0.0, %v417
    %v419 = vpop.f32.mrf.mxu0
    %v420 = vpop.f32.mrf.mxu0
    %v421 = vadd.f32 0.0, %v420
    %v422 = vpop.f32.mrf.mxu0
    %423 = vdwg.mxu0
    %v424 = vadd.f32 %v310, %v418
    %v425 = vadd.f32 %v313, %v421
    %v426 = vld [vmem:[%s99 + $0x3] sm:$0xff]
    %v427 = vld [vmem:[%s99 + $0xb] sm:$0xff]
    %v428 = vpack.c.bf16 %v427, %v426
    %v429 = vld [vmem:[#allocation4 + $0xc0] sm:$0xf]
    %v430 = vld [vmem:[#allocation4 + $0xc4] sm:$0xf]
    %v431 = vld [vmem:[#allocation4 + $0xc8] sm:$0xf]
    %v432 = vld [vmem:[#allocation4 + $0xcc] sm:$0xf]
    %v433 = vld [vmem:[#allocation4 + $0xd0] sm:$0xf]
    %v434 = vld [vmem:[#allocation4 + $0xd4] sm:$0xf]
    %v435 = vld [vmem:[#allocation4 + $0xd8] sm:$0xf]
    %v436 = vld [vmem:[#allocation4 + $0xdc] sm:$0xf]
    %v437 = vld [vmem:[#allocation4 + $0xe0] sm:$0xf]
    %v438 = vld [vmem:[#allocation4 + $0xe4] sm:$0xf]
    %v439 = vld [vmem:[#allocation4 + $0xe8] sm:$0xf]
    %v440 = vld [vmem:[#allocation4 + $0xec] sm:$0xf]
    %v441 = vld [vmem:[#allocation4 + $0xf0] sm:$0xf]
    %v442 = vld [vmem:[#allocation4 + $0xf4] sm:$0xf]
    %v443 = vld [vmem:[#allocation4 + $0xf8] sm:$0xf]
    %v444 = vld [vmem:[#allocation4 + $0xfc] sm:$0xf]
    %v461 = vunpack.c.l.b16 %v429
    %v462 = vunpack.c.l.b16 %v430
    %v463 = vunpack.c.l.b16 %v431
    %v464 = vunpack.c.l.b16 %v432
    %v465 = vunpack.c.l.b16 %v433
    %v466 = vunpack.c.l.b16 %v434
    %v467 = vunpack.c.l.b16 %v435
    %v468 = vunpack.c.l.b16 %v436
    %v469 = vunpack.c.l.b16 %v437
    %v470 = vunpack.c.l.b16 %v438
    %v471 = vunpack.c.l.b16 %v439
    %v472 = vunpack.c.l.b16 %v440
    %v473 = vunpack.c.l.b16 %v441
    %v474 = vunpack.c.l.b16 %v442
    %v475 = vunpack.c.l.b16 %v443
    %v476 = vunpack.c.l.b16 %v444
    %v477 = vpack.c.b16 %v462, %v461
    %v478 = vpack.c.b16 %v464, %v463
    %v479 = vpack.c.b16 %v466, %v465
    %v480 = vpack.c.b16 %v468, %v467
    %v481 = vpack.c.b16 %v470, %v469
    %v482 = vpack.c.b16 %v472, %v471
    %v483 = vpack.c.b16 %v474, %v473
    %v484 = vpack.c.b16 %v476, %v475
    %493 = vmatprep.subr.bf16.mxu0 0
    %494 = vmatpush1.bf16.msra.mxu0 %v484
    %495 = vmatprep.subr.bf16.mxu0 0
    %496 = vmatpush1.bf16.msra.mxu0 %v483
    %497 = vmatprep.subr.bf16.mxu0 0
    %498 = vmatpush1.bf16.msra.mxu0 %v482
    %499 = vmatprep.subr.bf16.mxu0 0
    %500 = vmatpush1.bf16.msra.mxu0 %v481
    %501 = vmatprep.subr.bf16.mxu0 0
    %502 = vmatpush1.bf16.msra.mxu0 %v480
    %503 = vmatprep.subr.bf16.mxu0 0
    %504 = vmatpush1.bf16.msra.mxu0 %v479
    %505 = vmatprep.subr.bf16.mxu0 0
    %506 = vmatpush1.bf16.msra.mxu0 %v478
    %507 = vmatprep.subr.bf16.mxu0 0
    %508 = vmatpush1.bf16.msra.mxu0 %v477
    %509 = vmatprep.subr.bf16.mxu0 0
    %510 = vmatpush2.bf16.msra.mxu0 0
    %511 = vmatprep.subr.bf16.mxu0 0
    %512 = vmatpush2.bf16.msra.mxu0 0
    %513 = vmatprep.subr.bf16.mxu0 0
    %514 = vmatpush2.bf16.msra.mxu0 0
    %515 = vmatprep.subr.bf16.mxu0 0
    %516 = vmatpush2.bf16.msra.mxu0 0
    %517 = vmatprep.subr.bf16.mxu0 0
    %518 = vmatpush2.bf16.msra.mxu0 0
    %519 = vmatprep.subr.bf16.mxu0 0
    %520 = vmatpush2.bf16.msra.mxu0 0
    %521 = vmatprep.subr.bf16.mxu0 0
    %522 = vmatpush2.bf16.msra.mxu0 0
    %523 = vmatprep.subr.bf16.mxu0 0
    %524 = vmatpush2.bf16.msra.mxu0 0
    %525 = vmatprep.mubr.bf16.mxu0 0
    %526 = vmatmul.mubr.bf16.gmra.mxu0 %v428
    %v527 = vpop.f32.mrf.mxu0
    %v528 = vadd.f32 0.0, %v527
    %v529 = vpop.f32.mrf.mxu0
    %v530 = vpop.f32.mrf.mxu0
    %v531 = vadd.f32 0.0, %v530
    %v532 = vpop.f32.mrf.mxu0
    %533 = vdwg.mxu0
    %v534 = vadd.f32 %v424, %v528
    %v535 = vadd.f32 %v425, %v531
    %v536 = vld [vmem:[%s99 + $0x4] sm:$0xff]
    %v537 = vld [vmem:[%s99 + $0xc] sm:$0xff]
    %v538 = vpack.c.bf16 %v537, %v536
    %v539 = vld [vmem:[#allocation4 + $0x100] sm:$0xf]
    %v540 = vld [vmem:[#allocation4 + $0x104] sm:$0xf]
    %v541 = vld [vmem:[#allocation4 + $0x108] sm:$0xf]
    %v542 = vld [vmem:[#allocation4 + $0x10c] sm:$0xf]
    %v543 = vld [vmem:[#allocation4 + $0x110] sm:$0xf]
    %v544 = vld [vmem:[#allocation4 + $0x114] sm:$0xf]
    %v545 = vld [vmem:[#allocation4 + $0x118] sm:$0xf]
    %v546 = vld [vmem:[#allocation4 + $0x11c] sm:$0xf]
    %v547 = vld [vmem:[#allocation4 + $0x120] sm:$0xf]
    %v548 = vld [vmem:[#allocation4 + $0x124] sm:$0xf]
    %v549 = vld [vmem:[#allocation4 + $0x128] sm:$0xf]
    %v550 = vld [vmem:[#allocation4 + $0x12c] sm:$0xf]
    %v551 = vld [vmem:[#allocation4 + $0x130] sm:$0xf]
    %v552 = vld [vmem:[#allocation4 + $0x134] sm:$0xf]
    %v553 = vld [vmem:[#allocation4 + $0x138] sm:$0xf]
    %v554 = vld [vmem:[#allocation4 + $0x13c] sm:$0xf]
    %v571 = vunpack.c.l.b16 %v539
    %v572 = vunpack.c.l.b16 %v540
    %v573 = vunpack.c.l.b16 %v541
    %v574 = vunpack.c.l.b16 %v542
    %v575 = vunpack.c.l.b16 %v543
    %v576 = vunpack.c.l.b16 %v544
    %v577 = vunpack.c.l.b16 %v545
    %v578 = vunpack.c.l.b16 %v546
    %v579 = vunpack.c.l.b16 %v547
    %v580 = vunpack.c.l.b16 %v548
    %v581 = vunpack.c.l.b16 %v549
    %v582 = vunpack.c.l.b16 %v550
    %v583 = vunpack.c.l.b16 %v551
    %v584 = vunpack.c.l.b16 %v552
    %v585 = vunpack.c.l.b16 %v553
    %v586 = vunpack.c.l.b16 %v554
    %v587 = vpack.c.b16 %v572, %v571
    %v588 = vpack.c.b16 %v574, %v573
    %v589 = vpack.c.b16 %v576, %v575
    %v590 = vpack.c.b16 %v578, %v577
    %v591 = vpack.c.b16 %v580, %v579
    %v592 = vpack.c.b16 %v582, %v581
    %v593 = vpack.c.b16 %v584, %v583
    %v594 = vpack.c.b16 %v586, %v585
    %603 = vmatprep.subr.bf16.mxu0 0
    %604 = vmatpush1.bf16.msra.mxu0 %v594
    %605 = vmatprep.subr.bf16.mxu0 0
    %606 = vmatpush1.bf16.msra.mxu0 %v593
    %607 = vmatprep.subr.bf16.mxu0 0
    %608 = vmatpush1.bf16.msra.mxu0 %v592
    %609 = vmatprep.subr.bf16.mxu0 0
    %610 = vmatpush1.bf16.msra.mxu0 %v591
    %611 = vmatprep.subr.bf16.mxu0 0
    %612 = vmatpush1.bf16.msra.mxu0 %v590
    %613 = vmatprep.subr.bf16.mxu0 0
    %614 = vmatpush1.bf16.msra.mxu0 %v589
    %615 = vmatprep.subr.bf16.mxu0 0
    %616 = vmatpush1.bf16.msra.mxu0 %v588
    %617 = vmatprep.subr.bf16.mxu0 0
    %618 = vmatpush1.bf16.msra.mxu0 %v587
    %619 = vmatprep.subr.bf16.mxu0 0
    %620 = vmatpush2.bf16.msra.mxu0 0
    %621 = vmatprep.subr.bf16.mxu0 0
    %622 = vmatpush2.bf16.msra.mxu0 0
    %623 = vmatprep.subr.bf16.mxu0 0
    %624 = vmatpush2.bf16.msra.mxu0 0
    %625 = vmatprep.subr.bf16.mxu0 0
    %626 = vmatpush2.bf16.msra.mxu0 0
    %627 = vmatprep.subr.bf16.mxu0 0
    %628 = vmatpush2.bf16.msra.mxu0 0
    %629 = vmatprep.subr.bf16.mxu0 0
    %630 = vmatpush2.bf16.msra.mxu0 0
    %631 = vmatprep.subr.bf16.mxu0 0
    %632 = vmatpush2.bf16.msra.mxu0 0
    %633 = vmatprep.subr.bf16.mxu0 0
    %634 = vmatpush2.bf16.msra.mxu0 0
    %635 = vmatprep.mubr.bf16.mxu0 0
    %636 = vmatmul.mubr.bf16.gmra.mxu0 %v538
    %v637 = vpop.f32.mrf.mxu0
    %v638 = vadd.f32 0.0, %v637
    %v639 = vpop.f32.mrf.mxu0
    %v640 = vpop.f32.mrf.mxu0
    %v641 = vadd.f32 0.0, %v640
    %v642 = vpop.f32.mrf.mxu0
    %643 = vdwg.mxu0
    %v644 = vadd.f32 %v534, %v638
    %v645 = vadd.f32 %v535, %v641
    %v646 = vld [vmem:[%s2] sm:$0x1]
    %v648 = vlaneseq
    %v649 = vshrl.u32 %v648, 7
    %v650 = vsub.s32 0, %v649
    %v651 = vrot.slane %v646, %v650
    %v653 = vadd.f32 %v644, %v651
    %v654 = vadd.f32 %v645, %v651
    %655 = vst [vmem:[#allocation7] sm:$0xff] %v653
    %656 = vst [vmem:[#allocation7 + $0x8] sm:$0xff] %v654
    // Predicated region
    $region42: #{tpu_custom_call.1} parent=1 // pred_check
      _
    $region43: #{tpu_custom_call.1} parent=1 // pred_check_branch
      %658 = sbr.rel (0) target = $region45
    $region44: #{tpu_custom_call.1} parent=1 // pred_region
      %s659 = sadd.s32 0, 0
      %s660 = smul.u32 2, %s659
      %s662 = ssub.s32 256, 256
      %663 = vsyncadd [#allocation6], %s662
      %s664 = smul.addr %s660, 128
      %s665 = scalar_lea.hbm %s3, %s664
      %s666 = sshll.u32 [#allocation7], 4
      %s667 = int_to_ptr.vmem [resolvable:$true] %s666
      %672 = dma.vmem_to_hbm [thread:$0]  %s667, 256, %s665, [#allocation6], 128, 128, 8
    $region45: #{tpu_custom_call.1} parent=1 // pred_fallthru
      _
    // Predicated region
    $region46: #{tpu_custom_call.1} parent=1 // pred_check
      _
    $region47: #{tpu_custom_call.1} parent=1 // pred_check_branch
      %674 = sbr.rel (0) target = $region49
    $region48: #{tpu_custom_call.1} parent=1 // pred_region
      %675 = dma.done [#allocation6], 256
    $region49: #{tpu_custom_call.1} parent=1 // pred_fallthru
      _
    %676 = vsyncpa [#allocation5], 1
    %677 = vsyncpa [#allocation6], 1
  %678 = vsyncmov [#allocation3]
  %s679 = vpop.sfrf %678
  %p680 = scmp.eq.s32.totalorder %s679, 0
  %p681 = pneg %p680
  %683 = shalt.err (%p681)
  %s684 = scalar_lea.sflag [#allocation3], 1
  %685 = vsyncmov %s684
  %s686 = vpop.sfrf %685
  %p687 = scmp.eq.s32.totalorder %s686, 0
  %p688 = pneg %p687
  %690 = shalt.err (%p688)

</llo_original>
